<compile_context>
chip_gen: v5e
topology: v5e:2x2
jax: 0.10.0
libtpu: 0.0.40
codegen_flags: <defaults>
</compile_context>

<pallas_src>
import functools

import jax
import jax.numpy as jnp
from jax import lax
from jax.experimental import pallas as pl
from jax.experimental.pallas import tpu as pltpu


# ---------------------------------------------------------------------------
# Pallas kernel
# ---------------------------------------------------------------------------
def _ds_conv_kernel(x_ref, a_dw_ref, b1_ref, b_pw_ref, b2_ref, out_ref,
                    *, kernel_size, pad, has_residual):
    """Fused depthwise conv + BN1 + ReLU + pointwise conv + BN2 (+ residual).

    Merged-lane layout: the last axis packs nb batch images x W x C and is a
    multiple of 128 (lane-dense, full MXU width).

      x_ref    : (bt, H, L)      input tile (doubles as the residual)
      a_dw_ref : (k*L, L)        vertically-stacked banded depthwise matrices
                                 (BN1 scale folded), one L-row block per tap dy
      b1_ref   : (1, L)          BN1 bias, tiled along nb*W
      b_pw_ref : (L, Lout)       block-diagonal pointwise matrix (BN2 scale folded)
      b2_ref   : (1, Lout)       BN2 bias, tiled along nb*W
      out_ref  : (bt, H, Lout)
    """
    bt, h, lanes = x_ref.shape
    lanes_out = out_ref.shape[2]
    m = bt * h

    x = x_ref[...]                                          # (bt, H, L)
    # 'same' zero padding along H, built as values: no persistent scratch, no
    # per-step whole-buffer zero fill.
    zrow = jnp.zeros((bt, pad, lanes), x.dtype)
    xp = jnp.concatenate([zrow, x, zrow], axis=1)           # (bt, H + 2*pad, L)

    # Depthwise conv (+ folded BN1 scale) as ONE MXU matmul: the k H-shifted
    # taps are laid side by side along lanes, so K = k*L instead of k matmuls
    # with K = L (single MXU fill/drain, no zero-init + extra adds).
    lhs = jnp.concatenate(
        [xp[:, dy:dy + h, :] for dy in range(kernel_size)], axis=-1
    ).reshape(m, kernel_size * lanes)
    acc = jnp.dot(lhs, a_dw_ref[...], preferred_element_type=jnp.float32)

    # BN1 bias + ReLU in f32 (scale already folded into a_dw).
    y = jnp.maximum(acc + b1_ref[...], 0.0)

    # Pointwise 1x1 conv (+ folded BN2 scale) as a block-diagonal MXU matmul.
    y2 = jnp.dot(y.astype(b_pw_ref.dtype), b_pw_ref[...],
                 preferred_element_type=jnp.float32) + b2_ref[...]

    # Residual after BN2 (same merged layout, no extra DMA), like the module.
    if has_residual:
        y2 = y2 + x.reshape(m, lanes).astype(jnp.float32)

    out_ref[...] = y2.reshape(bt, h, lanes_out).astype(out_ref.dtype)


# ---------------------------------------------------------------------------
# Tiling heuristics
# ---------------------------------------------------------------------------
def _pick_lane_pack(n, woc, lane_target=128):
    """Smallest nb dividing the batch such that nb*W*C is a multiple of 128."""
    if woc % lane_target == 0:
        return 1
    for nb in range(1, n + 1):
        if n % nb == 0 and (nb * woc) % lane_target == 0:
            return nb
    return 1   # no divisor works: fall back to masked stores (still correct)


def _pick_batch_tile(n_groups, cap=8, min_grid_steps=2):
    """Largest divisor of n_groups (<= cap) that still leaves >= min_grid_steps
    grid steps, so both v7x TensorCores get work; otherwise the largest divisor.
    `cap` bounds per-step VMEM — re-derive when scaling shapes (v7x: 64 MiB)."""
    cap = max(1, min(cap, n_groups))
    fallback = None
    for bt in range(cap, 0, -1):
        if n_groups % bt == 0:
            if fallback is None:
                fallback = bt
            if n_groups // bt >= min_grid_steps:
                return bt
    return fallback if fallback is not None else 1


# ---------------------------------------------------------------------------
# Builder: fold / matriciate the weights ONCE, return a jitted apply(x_nhwc)
# ---------------------------------------------------------------------------
def make_ds_conv(w_dw, w_pw,
                 bn1_gamma, bn1_beta, bn1_mean, bn1_var,
                 bn2_gamma, bn2_beta, bn2_mean, bn2_var,
                 *, kernel_size, stride, input_shape, eps=1e-5,
                 compute_dtype=jnp.float32, out_dtype=jnp.float32,
                 batch_tile=None, lane_pack=None):
    """All per-weight-set work (BN folding, banded depthwise matrices, kron
    expansions, bias tiling) happens here, once; the hot path is the returned
    jitted closure (layout plumbing + pallas_call only)."""
    n, h, w, c_in = input_shape
    c_out = w_pw.shape[-1]
    pad = kernel_size // 2
    has_residual = (stride == 1) and (c_in == c_out)

    if stride != 1 or kernel_size % 2 == 0:
        # TODO(synk): Pallas fast path covers the stride=1 / odd-kernel config used
        # by this module instance; stride=2 configs fall back to XLA convolutions
        # with identical eval-mode math.
        def fallback(x_nhwc):
            return _reference(x_nhwc, w_dw, w_pw,
                              bn1_gamma, bn1_beta, bn1_mean, bn1_var,
                              bn2_gamma, bn2_beta, bn2_mean, bn2_var,
                              kernel_size=kernel_size, stride=stride,
                              eps=eps).astype(out_dtype)
        return jax.jit(fallback)

    # ---- fold BatchNorm (inference, running stats) into scale / bias --------
    s1 = bn1_gamma / jnp.sqrt(bn1_var + eps)
    b1 = bn1_beta - bn1_mean * s1
    s2 = bn2_gamma / jnp.sqrt(bn2_var + eps)
    b2 = bn2_beta - bn2_mean * s2
    w_dw_f = (w_dw * s1).astype(jnp.float32)                # (k, k, C)
    w_pw_f = (w_pw * s2).astype(jnp.float32)                # (C, Cout)

    # ---- lane packing: nb batch images share the lane axis ------------------
    woc = w * c_in
    nb = lane_pack if lane_pack is not None else _pick_lane_pack(n, woc)
    assert n % nb == 0
    n_groups = n // nb
    lanes = nb * woc                                         # 128 here
    lanes_out = nb * w * c_out

    # Depthwise taps along W as banded (W*C x W*C) matrices, one per kernel row;
    # band k=(pad-dx)*C maps input column (j+dx-pad) to output column j and the
    # eye() truncation provides the zero 'same' padding in W.  kron(eye(nb), .)
    # keeps the nb packed images independent.
    # NOTE: this matriciation is O((W*C)^2); it targets tiny channel counts like
    # this C=4 block.  For large W*C switch to a channel-contraction matmul with
    # C padded to the MXU width (see Buffered(1)/VMEM note at the in_specs).
    a_rows = []
    for dy in range(kernel_size):
        a = jnp.zeros((woc, woc), jnp.float32)
        for dx in range(kernel_size):
            band = jnp.eye(woc, k=(pad - dx) * c_in, dtype=jnp.float32)
            a = a + band * jnp.tile(w_dw_f[dy, dx], w)
        a_rows.append(jnp.kron(jnp.eye(nb, dtype=jnp.float32), a))   # (L, L)
    a_dw = jnp.concatenate(a_rows, axis=0).astype(compute_dtype)     # (k*L, L)

    # Pointwise 1x1 conv (+ BN2 scale) as a block-diagonal (L x Lout) matrix.
    b_pw = jnp.kron(jnp.eye(nb * w, dtype=jnp.float32), w_pw_f).astype(compute_dtype)

    # Biases stay f32 (post-matmul math is f32 on all gens; v5e VPU has no bf16).
    b1_t = jnp.tile(b1.astype(jnp.float32), nb * w).reshape(1, lanes)
    b2_t = jnp.tile(b2.astype(jnp.float32), nb * w).reshape(1, lanes_out)

    bt = batch_tile if batch_tile is not None else _pick_batch_tile(n_groups)
    assert n_groups % bt == 0

    kernel = functools.partial(_ds_conv_kernel, kernel_size=kernel_size,
                               pad=pad, has_residual=has_residual)

    grid_spec = pltpu.PrefetchScalarGridSpec(
        num_scalar_prefetch=0,
        grid=(n_groups // bt,),
        in_specs=[
            pl.BlockSpec((bt, h, lanes), lambda i: (i, 0, 0)),        # x (merged)
            # Constant-index weight blocks (tiny here).  When scaling shapes up
            # (esp. v7x's 64 MiB VMEM) mark these pipeline_mode=pl.Buffered(1)
            # and re-derive the batch-tile cap.
            pl.BlockSpec((kernel_size * lanes, lanes), lambda i: (0, 0)),
            pl.BlockSpec((1, lanes), lambda i: (0, 0)),
            pl.BlockSpec((lanes, lanes_out), lambda i: (0, 0)),
            pl.BlockSpec((1, lanes_out), lambda i: (0, 0)),
        ],
        out_specs=pl.BlockSpec((bt, h, lanes_out), lambda i: (i, 0, 0)),
    )

    pallas_fn = pl.pallas_call(
        kernel,
        out_shape=jax.ShapeDtypeStruct((n_groups, h, lanes_out), out_dtype),
        grid_spec=grid_spec,
        compiler_params=pltpu.CompilerParams(
            dimension_semantics=("parallel",),
            # Explicit scoped-VMEM budget: v5e defaults to 16 MiB, v6e/v7x to
            # 32 MiB; 32 MiB is safe on all generations and ample for these tiles.
            vmem_limit_bytes=32 << 20),
    )

    def apply(x_nhwc):
        # Hot path: layout plumbing only.  Pack nb batch images into the lane
        # axis -> (n_groups, H, nb*W*C) with image index major inside the lanes.
        x_m = x_nhwc.astype(compute_dtype).reshape(n_groups, nb, h, woc)
        x_m = x_m.transpose(0, 2, 1, 3).reshape(n_groups, h, lanes)
        out_m = pallas_fn(x_m, a_dw, b1_t, b_pw, b2_t)
        out = out_m.reshape(n_groups, h, nb, w, c_out)
        return out.transpose(0, 2, 1, 3, 4).reshape(n, h, w, c_out)

    # TODO(synk): at this problem size (~16 KB) the block is launch-overhead
    # bound; fusing several consecutive DS blocks into one pallas_call is the
    # next-level optimization (call-site integration, not done here).
    return jax.jit(apply)


# ---------------------------------------------------------------------------
# Pure-JAX reference (mirrors PyTorch eval-mode semantics) in NHWC
# ---------------------------------------------------------------------------
def _reference(x_nhwc, w_dw, w_pw,
               bn1_gamma, bn1_beta, bn1_mean, bn1_var,
               bn2_gamma, bn2_beta, bn2_mean, bn2_var,
               *, kernel_size, stride, eps=1e-5):
    c_in = x_nhwc.shape[-1]
    c_out = w_pw.shape[-1]
    pad = kernel_size // 2
    has_residual = (stride == 1) and (c_in == c_out)

    w_dw_hwio = w_dw.reshape(kernel_size, kernel_size, 1, c_in)
    y = lax.conv_general_dilated(
        x_nhwc, w_dw_hwio, window_strides=(stride, stride),
        padding=[(pad, pad), (pad, pad)],
        dimension_numbers=("NHWC", "HWIO", "NHWC"),
        feature_group_count=c_in)
    y = (y - bn1_mean) / jnp.sqrt(bn1_var + eps) * bn1_gamma + bn1_beta
    y = jnp.maximum(y, 0.0)
    y = lax.conv_general_dilated(
        y, w_pw.reshape(1, 1, c_in, c_out), window_strides=(1, 1),
        padding=[(0, 0), (0, 0)],
        dimension_numbers=("NHWC", "HWIO", "NHWC"))
    y = (y - bn2_mean) / jnp.sqrt(bn2_var + eps) * bn2_gamma + bn2_beta
    if has_residual:
        y = y + x_nhwc
    return y


if __name__ == "__main__":
    # BlockDefine('ds', kernel_size=3, stride=1, exp_ratio=1.0, out_channels=4),
    # in_channels=4  -> has_residual = True
    N, H, W = 2, 16, 16
    C_IN, C_OUT, K, STRIDE = 4, 4, 3, 1

    key = jax.random.PRNGKey(0)
    keys = jax.random.split(key, 3)
    x = jax.random.normal(keys[0], (N, H, W, C_IN), dtype=jnp.float32)          # NHWC input
    w_dw = jax.random.normal(keys[1], (K, K, C_IN), dtype=jnp.float32) * 0.2    # depthwise weights
    w_pw = jax.random.normal(keys[2], (C_IN, C_OUT), dtype=jnp.float32) * 0.2   # pointwise weights

    # Deterministic BatchNorm parameters / running stats.
    bn1_gamma = 1.0 + 0.1 * jnp.arange(C_IN, dtype=jnp.float32)
    bn1_beta = 0.05 * jnp.arange(C_IN, dtype=jnp.float32)
    bn1_mean = 0.1 * jnp.arange(C_IN, dtype=jnp.float32)
    bn1_var = 1.0 + 0.05 * jnp.arange(C_IN, dtype=jnp.float32)
    bn2_gamma = 1.0 - 0.05 * jnp.arange(C_OUT, dtype=jnp.float32)
    bn2_beta = -0.02 * jnp.arange(C_OUT, dtype=jnp.float32)
    bn2_mean = 0.03 * jnp.arange(C_OUT, dtype=jnp.float32)
    bn2_var = 1.0 + 0.02 * jnp.arange(C_OUT, dtype=jnp.float32)

    ref = _reference(
        x, w_dw, w_pw,
        bn1_gamma, bn1_beta, bn1_mean, bn1_var,
        bn2_gamma, bn2_beta, bn2_mean, bn2_var,
        kernel_size=K, stride=STRIDE)

    # Weight folding / matriciation done once; apply() is the cached hot path.
    ds_f32 = make_ds_conv(
        w_dw, w_pw,
        bn1_gamma, bn1_beta, bn1_mean, bn1_var,
        bn2_gamma, bn2_beta, bn2_mean, bn2_var,
        kernel_size=K, stride=STRIDE, input_shape=(N, H, W, C_IN),
        compute_dtype=jnp.float32)
    out = jax.block_until_ready(ds_f32(x))
    assert out.shape == ref.shape
    assert jnp.allclose(out, ref, atol=1e-4, rtol=1e-4), \
        "Pallas kernel (f32) mismatch vs reference"

    # bf16 streaming path (half HBM/VMEM traffic); accumulation and bias/ReLU/
    # residual math stay f32, so a loose tolerance vs the f32 reference suffices.
    ds_bf16 = make_ds_conv(
        w_dw, w_pw,
        bn1_gamma, bn1_beta, bn1_mean, bn1_var,
        bn2_gamma, bn2_beta, bn2_mean, bn2_var,
        kernel_size=K, stride=STRIDE, input_shape=(N, H, W, C_IN),
        compute_dtype=jnp.bfloat16)
    out_bf16 = jax.block_until_ready(ds_bf16(x))
    assert jnp.allclose(out_bf16, ref, atol=5e-2, rtol=5e-2), \
        "Pallas kernel (bf16) mismatch vs reference"

    print("KERNEL_OK")
</pallas_src>

<mosaic_0001>
module attributes {stable_mosaic.version = 11 : i64} {
  func.func @_ds_conv_kernel(%arg0: i32, %arg1: memref<1x16x128xf32, #tpu.memory_space<vmem>>, %arg2: memref<384x128xf32, #tpu.memory_space<vmem>>, %arg3: memref<1x128xf32, #tpu.memory_space<vmem>>, %arg4: memref<128x128xf32, #tpu.memory_space<vmem>>, %arg5: memref<1x128xf32, #tpu.memory_space<vmem>>, %arg6: memref<1x16x128xf32, #tpu.memory_space<vmem>>) attributes {dimension_semantics = [#tpu.dimension_semantics<parallel>], iteration_bounds = array<i64: 1>, scalar_prefetch = 0 : i64, scratch_operands = 0 : i64, tpu.core_type = #tpu.core_type<tc>, window_params = [{transform_indices = @transform_0, window_bounds = array<i64: 1, 16, 128>}, {pipeline_mode = #tpu.pipeline_mode<synchronous>, transform_indices = @transform_1, window_bounds = array<i64: 384, 128>}, {pipeline_mode = #tpu.pipeline_mode<synchronous>, transform_indices = @transform_2, window_bounds = array<i64: 1, 128>}, {pipeline_mode = #tpu.pipeline_mode<synchronous>, transform_indices = @transform_3, window_bounds = array<i64: 128, 128>}, {pipeline_mode = #tpu.pipeline_mode<synchronous>, transform_indices = @transform_4, window_bounds = array<i64: 1, 128>}, {transform_indices = @transform_5, window_bounds = array<i64: 1, 16, 128>}]} {
    %c0 = arith.constant 0 : index
    %c0_0 = arith.constant 0 : index
    %c0_1 = arith.constant 0 : index
    %0 = vector.load %arg1[%c0, %c0_0, %c0_1] : memref<1x16x128xf32, #tpu.memory_space<vmem>>, vector<1x16x128xf32>
    %cst = arith.constant 0.000000e+00 : f32
    %1 = vector.broadcast %cst : f32 to vector<1x1x128xf32>
    %2 = tpu.concatenate %1, %0, %1 in 1 : vector<1x1x128xf32>, vector<1x16x128xf32>, vector<1x1x128xf32> -> vector<1x18x128xf32>
    %3 = vector.extract_strided_slice %2 {offsets = [0, 0, 0], sizes = [1, 16, 128], strides = [1, 1, 1]} : vector<1x18x128xf32> to vector<1x16x128xf32>
    %4 = vector.extract_strided_slice %2 {offsets = [0, 1, 0], sizes = [1, 16, 128], strides = [1, 1, 1]} : vector<1x18x128xf32> to vector<1x16x128xf32>
    %5 = vector.extract_strided_slice %2 {offsets = [0, 2, 0], sizes = [1, 16, 128], strides = [1, 1, 1]} : vector<1x18x128xf32> to vector<1x16x128xf32>
    %6 = tpu.concatenate %3, %4, %5 in 2 : vector<1x16x128xf32>, vector<1x16x128xf32>, vector<1x16x128xf32> -> vector<1x16x384xf32>
    %7 = vector.shape_cast %6 : vector<1x16x384xf32> to vector<16x384xf32>
    %c0_2 = arith.constant 0 : index
    %c0_3 = arith.constant 0 : index
    %8 = vector.load %arg2[%c0_2, %c0_3] : memref<384x128xf32, #tpu.memory_space<vmem>>, vector<384x128xf32>
    %cst_4 = arith.constant dense<0.000000e+00> : vector<16x128xf32>
    %9 = tpu.matmul %7, %8, %cst_4 {dimension_numbers = #tpu.dot_dimension_numbers<[1], [0], [0], [1], [0, 0, 1, 1], [], []>} : vector<16x384xf32>, vector<384x128xf32>, vector<16x128xf32> -> vector<16x128xf32>
    %c0_5 = arith.constant 0 : index
    %c0_6 = arith.constant 0 : index
    %10 = vector.load %arg3[%c0_5, %c0_6] : memref<1x128xf32, #tpu.memory_space<vmem>>, vector<1x128xf32>
    %11 = vector.broadcast %10 : vector<1x128xf32> to vector<16x128xf32>
    %12 = arith.addf %9, %11 : vector<16x128xf32>
    %cst_7 = arith.constant 0.000000e+00 : f32
    %13 = vector.broadcast %cst_7 : f32 to vector<16x128xf32>
    %14 = arith.maximumf %12, %13 : vector<16x128xf32>
    %c0_8 = arith.constant 0 : index
    %c0_9 = arith.constant 0 : index
    %15 = vector.load %arg4[%c0_8, %c0_9] : memref<128x128xf32, #tpu.memory_space<vmem>>, vector<128x128xf32>
    %cst_10 = arith.constant dense<0.000000e+00> : vector<16x128xf32>
    %16 = tpu.matmul %14, %15, %cst_10 {dimension_numbers = #tpu.dot_dimension_numbers<[1], [0], [0], [1], [0, 0, 1, 1], [], []>} : vector<16x128xf32>, vector<128x128xf32>, vector<16x128xf32> -> vector<16x128xf32>
    %c0_11 = arith.constant 0 : index
    %c0_12 = arith.constant 0 : index
    %17 = vector.load %arg5[%c0_11, %c0_12] : memref<1x128xf32, #tpu.memory_space<vmem>>, vector<1x128xf32>
    %18 = vector.broadcast %17 : vector<1x128xf32> to vector<16x128xf32>
    %19 = arith.addf %16, %18 : vector<16x128xf32>
    %20 = vector.shape_cast %0 : vector<1x16x128xf32> to vector<16x128xf32>
    %21 = arith.addf %19, %20 : vector<16x128xf32>
    %22 = vector.shape_cast %21 : vector<16x128xf32> to vector<1x16x128xf32>
    %c0_13 = arith.constant 0 : index
    %c0_14 = arith.constant 0 : index
    %c0_15 = arith.constant 0 : index
    %23 = vector.load %arg6[%c0_13, %c0_14, %c0_15] : memref<1x16x128xf32, #tpu.memory_space<vmem>>, vector<1x16x128xf32>
    tpu.vector_store %arg6[%c0_13, %c0_14, %c0_15], %22 {strides = array<i32>} : memref<1x16x128xf32, #tpu.memory_space<vmem>>, vector<1x16x128xf32>,
    return
  }
  func.func @transform_0(%arg0: i32) -> (i32, i32, i32) {
    %c0_i32 = arith.constant 0 : i32
    %c0_i32_0 = arith.constant 0 : i32
    %c0_i32_1 = arith.constant 0 : i32
    return %arg0, %c0_i32, %c0_i32_0 : i32, i32, i32
  }
  func.func @transform_1(%arg0: i32) -> (i32, i32) {
    %c0_i32 = arith.constant 0 : i32
    %c0_i32_0 = arith.constant 0 : i32
    %c0_i32_1 = arith.constant 0 : i32
    return %c0_i32, %c0_i32_0 : i32, i32
  }
  func.func @transform_2(%arg0: i32) -> (i32, i32) {
    %c0_i32 = arith.constant 0 : i32
    %c0_i32_0 = arith.constant 0 : i32
    %c0_i32_1 = arith.constant 0 : i32
    return %c0_i32, %c0_i32_0 : i32, i32
  }
  func.func @transform_3(%arg0: i32) -> (i32, i32) {
    %c0_i32 = arith.constant 0 : i32
    %c0_i32_0 = arith.constant 0 : i32
    %c0_i32_1 = arith.constant 0 : i32
    return %c0_i32, %c0_i32_0 : i32, i32
  }
  func.func @transform_4(%arg0: i32) -> (i32, i32) {
    %c0_i32 = arith.constant 0 : i32
    %c0_i32_0 = arith.constant 0 : i32
    %c0_i32_1 = arith.constant 0 : i32
    return %c0_i32, %c0_i32_0 : i32, i32
  }
  func.func @transform_5(%arg0: i32) -> (i32, i32, i32) {
    %c0_i32 = arith.constant 0 : i32
    %c0_i32_0 = arith.constant 0 : i32
    %c0_i32_1 = arith.constant 0 : i32
    return %arg0, %c0_i32, %c0_i32_0 : i32, i32, i32
  }
}

</mosaic_0001>

<llo_original>
// kernel: apply.1
$region0: #{apply.1}
  #allocation0 [shape = 'u32[]', space=smem, size = 0x4, offset = 0x4, fixed_abs, tag = 'smem constant byte address 0x4 - core index']
  #allocation1 [shape = 'u32[72,128]{1,0:T(1,128)}', space=vmem, size = 0x9000, scoped, tag = 'internal scratch']
  %s0 = inlined_call_operand.vmem [shape: f32[1,16,128], index: 0, kind: input, shape index: {}]
  %s1 = inlined_call_operand.vmem [shape: f32[384,128], index: 1, kind: input, shape index: {}]
  %s2 = inlined_call_operand.vmem [shape: f32[1,128], index: 2, kind: input, shape index: {}]
  %s3 = inlined_call_operand.hbm [shape: f32[128,128], index: 3, kind: input, shape index: {}]
  %s4 = inlined_call_operand.vmem [shape: f32[1,128], index: 4, kind: input, shape index: {}]
  %s5 = inlined_call_operand.vmem [shape: f32[1,16,128], index: 5, kind: output, shape index: {}]
  %s6 = sld [smem:[#allocation0]]
  $region34: #{apply.1} parent=0
    _
  %s8 = ssub.s32 1, %s6
  %s9 = scalar_select 0, %s8, %s6
  $region1: #{apply.1} parent=0
    #allocation2 [shape = 'u8[65536]{0}', space=vmem, size = 0x10000, scoped, tag = 'input window, operand 3, single buffered']
    #allocation3 [shape = 's32[1]{0}', space=sflag, size = 0x4, scoped, tag = 'scoped memory for apply.1']
    %10 = vsyncpa [#allocation3], 0
    // Predicated region
    $region2: #{apply.1} parent=1 // pred_check
      _
    $region3: #{apply.1} parent=1 // pred_check_branch
      %12 = sbr.rel (0) target = $region5
    $region4: #{apply.1} parent=1 // pred_region
      _
    $region5: #{apply.1} parent=1 // pred_fallthru
      _
    // Predicated region
    $region6: #{apply.1} parent=1 // pred_check
      _
    $region7: #{apply.1} parent=1 // pred_check_branch
      %14 = sbr.rel (0) target = $region9
    $region8: #{apply.1} parent=1 // pred_region
      _
    $region9: #{apply.1} parent=1 // pred_fallthru
      _
    // Predicated region
    $region10: #{apply.1} parent=1 // pred_check
      _
    $region11: #{apply.1} parent=1 // pred_check_branch
      %16 = sbr.rel (0) target = $region13
    $region12: #{apply.1} parent=1 // pred_region
      _
    $region13: #{apply.1} parent=1 // pred_fallthru
      _
    // Predicated region
    $region14: #{apply.1} parent=1 // pred_check
      _
    $region15: #{apply.1} parent=1 // pred_check_branch
      %18 = sbr.rel (0) target = $region17
    $region16: #{apply.1} parent=1 // pred_region
      %20 = vsyncadd [#allocation3], 0
      %s21 = sshll.u32 %s3, 4
      %s22 = int_to_ptr.hbm [resolvable:$true] %s21
      %s23 = sshll.u32 [#allocation2], 4
      %s24 = int_to_ptr.vmem [resolvable:$true] %s23
      %29 = dma.hbm_to_vmem [thread:$0]  %s22, 2048, %s24, [#allocation3], 128, 128, 8
    $region17: #{apply.1} parent=1 // pred_fallthru
      _
    // Predicated region
    $region18: #{apply.1} parent=1 // pred_check
      _
    $region19: #{apply.1} parent=1 // pred_check_branch
      %31 = sbr.rel (0) target = $region21
    $region20: #{apply.1} parent=1 // pred_region
      _
    $region21: #{apply.1} parent=1 // pred_fallthru
      _
    // Predicated region
    $region22: #{apply.1} parent=1 // pred_check
      _
    $region23: #{apply.1} parent=1 // pred_check_branch
      %33 = sbr.rel (0) target = $region25
    $region24: #{apply.1} parent=1 // pred_region
      %35 = dma.done [#allocation3], 2048
    $region25: #{apply.1} parent=1 // pred_fallthru
      _
    %v36 = vld [vmem:[%s0] sm:$0xff]
    %v37 = vld [vmem:[%s0 + $0x8] sm:$0xff]
    %vm40 = vcmask 1040384
    %v41 = vrot.slane %v36, 7
    %v42 = vrot.slane %v37, 7
    %v43 = vsel %vm40, %v41, %v42
    %v47 = vsel %vm40, 0.0, %v41
    %v48 = vsel %vm40, %v42, 0.0
    %vm51 = vcmask 1046528
    %v52 = vrot.slane %v47, 1
    %v53 = vrot.slane %v43, 1
    %v54 = vsel %vm51, %v52, %v53
    %v55 = vrot.slane %v48, 1
    %v56 = vsel %vm51, %v53, %v55
    %vm59 = vcmask 1045504
    %v60 = vrot.slane %v47, 2
    %v61 = vrot.slane %v43, 2
    %v62 = vsel %vm59, %v60, %v61
    %v63 = vrot.slane %v48, 2
    %v64 = vsel %vm59, %v61, %v63
    %v67 = vld [vmem:[%s1] sm:$0xff]
    %v68 = vld [vmem:[%s1 + $0x8] sm:$0xff]
    %v69 = vld [vmem:[%s1 + $0x10] sm:$0xff]
    %v70 = vld [vmem:[%s1 + $0x18] sm:$0xff]
    %v71 = vld [vmem:[%s1 + $0x20] sm:$0xff]
    %v72 = vld [vmem:[%s1 + $0x28] sm:$0xff]
    %v73 = vld [vmem:[%s1 + $0x30] sm:$0xff]
    %v74 = vld [vmem:[%s1 + $0x38] sm:$0xff]
    %v75 = vld [vmem:[%s1 + $0x40] sm:$0xff]
    %v76 = vld [vmem:[%s1 + $0x48] sm:$0xff]
    %v77 = vld [vmem:[%s1 + $0x50] sm:$0xff]
    %v78 = vld [vmem:[%s1 + $0x58] sm:$0xff]
    %v79 = vld [vmem:[%s1 + $0x60] sm:$0xff]
    %v80 = vld [vmem:[%s1 + $0x68] sm:$0xff]
    %v81 = vld [vmem:[%s1 + $0x70] sm:$0xff]
    %v82 = vld [vmem:[%s1 + $0x78] sm:$0xff]
    %v83 = vld [vmem:[%s1 + $0x80] sm:$0xff]
    %v84 = vld [vmem:[%s1 + $0x88] sm:$0xff]
    %v85 = vld [vmem:[%s1 + $0x90] sm:$0xff]
    %v86 = vld [vmem:[%s1 + $0x98] sm:$0xff]
    %v87 = vld [vmem:[%s1 + $0xa0] sm:$0xff]
    %v88 = vld [vmem:[%s1 + $0xa8] sm:$0xff]
    %v89 = vld [vmem:[%s1 + $0xb0] sm:$0xff]
    %v90 = vld [vmem:[%s1 + $0xb8] sm:$0xff]
    %v91 = vld [vmem:[%s1 + $0xc0] sm:$0xff]
    %v92 = vld [vmem:[%s1 + $0xc8] sm:$0xff]
    %v93 = vld [vmem:[%s1 + $0xd0] sm:$0xff]
    %v94 = vld [vmem:[%s1 + $0xd8] sm:$0xff]
    %v95 = vld [vmem:[%s1 + $0xe0] sm:$0xff]
    %v96 = vld [vmem:[%s1 + $0xe8] sm:$0xff]
    %v97 = vld [vmem:[%s1 + $0xf0] sm:$0xff]
    %v98 = vld [vmem:[%s1 + $0xf8] sm:$0xff]
    %v99 = vld [vmem:[%s1 + $0x100] sm:$0xff]
    %v100 = vld [vmem:[%s1 + $0x108] sm:$0xff]
    %v101 = vld [vmem:[%s1 + $0x110] sm:$0xff]
    %v102 = vld [vmem:[%s1 + $0x118] sm:$0xff]
    %v103 = vld [vmem:[%s1 + $0x120] sm:$0xff]
    %v104 = vld [vmem:[%s1 + $0x128] sm:$0xff]
    %v105 = vld [vmem:[%s1 + $0x130] sm:$0xff]
    %v106 = vld [vmem:[%s1 + $0x138] sm:$0xff]
    %v107 = vld [vmem:[%s1 + $0x140] sm:$0xff]
    %v108 = vld [vmem:[%s1 + $0x148] sm:$0xff]
    %v109 = vld [vmem:[%s1 + $0x150] sm:$0xff]
    %v110 = vld [vmem:[%s1 + $0x158] sm:$0xff]
    %v111 = vld [vmem:[%s1 + $0x160] sm:$0xff]
    %v112 = vld [vmem:[%s1 + $0x168] sm:$0xff]
    %v113 = vld [vmem:[%s1 + $0x170] sm:$0xff]
    %v114 = vld [vmem:[%s1 + $0x178] sm:$0xff]
    %v115 = vld [vmem:[%s2] sm:$0x1]
    %v117 = vperm.slane %v115, 0
    %119 = vmatpush.msra.mxu0 %v82
    %120 = vmatpush.msra.mxu0 %v81
    %121 = vmatpush.msra.mxu0 %v80
    %122 = vmatpush.msra.mxu0 %v79
    %123 = vmatpush.msra.mxu0 %v78
    %124 = vmatpush.msra.mxu0 %v77
    %125 = vmatpush.msra.mxu0 %v76
    %126 = vmatpush.msra.mxu0 %v75
    %127 = vmatpush.msra.mxu0 %v74
    %128 = vmatpush.msra.mxu0 %v73
    %129 = vmatpush.msra.mxu0 %v72
    %130 = vmatpush.msra.mxu0 %v71
    %131 = vmatpush.msra.mxu0 %v70
    %132 = vmatpush.msra.mxu0 %v69
    %133 = vmatpush.msra.mxu0 %v68
    %134 = vmatpush.msra.mxu0 %v67
    %135 = vmatmul.f32.gmra.mxu0 %v47
    %v136 = vpop.f32.mrf.mxu0
    %v137 = vadd.f32 %v117, %v136
    %138 = vmatmul.f32.gmra.mxu0 %v43
    %v139 = vpop.f32.mrf.mxu0
    %v140 = vadd.f32 %v117, %v139
    %141 = vdwg.mxu0
    %142 = vmatpush.msra.mxu0 %v98
    %143 = vmatpush.msra.mxu0 %v97
    %144 = vmatpush.msra.mxu0 %v96
    %145 = vmatpush.msra.mxu0 %v95
    %146 = vmatpush.msra.mxu0 %v94
    %147 = vmatpush.msra.mxu0 %v93
    %148 = vmatpush.msra.mxu0 %v92
    %149 = vmatpush.msra.mxu0 %v91
    %150 = vmatpush.msra.mxu0 %v90
    %151 = vmatpush.msra.mxu0 %v89
    %152 = vmatpush.msra.mxu0 %v88
    %153 = vmatpush.msra.mxu0 %v87
    %154 = vmatpush.msra.mxu0 %v86
    %155 = vmatpush.msra.mxu0 %v85
    %156 = vmatpush.msra.mxu0 %v84
    %157 = vmatpush.msra.mxu0 %v83
    %158 = vmatmul.f32.gmra.mxu0 %v54
    %v159 = vpop.f32.mrf.mxu0
    %v160 = vadd.f32 %v137, %v159
    %161 = vmatmul.f32.gmra.mxu0 %v56
    %v162 = vpop.f32.mrf.mxu0
    %v163 = vadd.f32 %v140, %v162
    %164 = vdwg.mxu0
    %165 = vmatpush.msra.mxu0 %v114
    %166 = vmatpush.msra.mxu0 %v113
    %167 = vmatpush.msra.mxu0 %v112
    %168 = vmatpush.msra.mxu0 %v111
    %169 = vmatpush.msra.mxu0 %v110
    %170 = vmatpush.msra.mxu0 %v109
    %171 = vmatpush.msra.mxu0 %v108
    %172 = vmatpush.msra.mxu0 %v107
    %173 = vmatpush.msra.mxu0 %v106
    %174 = vmatpush.msra.mxu0 %v105
    %175 = vmatpush.msra.mxu0 %v104
    %176 = vmatpush.msra.mxu0 %v103
    %177 = vmatpush.msra.mxu0 %v102
    %178 = vmatpush.msra.mxu0 %v101
    %179 = vmatpush.msra.mxu0 %v100
    %180 = vmatpush.msra.mxu0 %v99
    %181 = vmatmul.f32.gmra.mxu0 %v62
    %v182 = vpop.f32.mrf.mxu0
    %v183 = vadd.f32 %v160, %v182
    %184 = vmatmul.f32.gmra.mxu0 %v64
    %v185 = vpop.f32.mrf.mxu0
    %v186 = vadd.f32 %v163, %v185
    %187 = vdwg.mxu0
    %v188 = vmax.f32 %v183, 0.0
    %v189 = vmax.f32 %v186, 0.0
    %v190 = vld [vmem:[#allocation2] sm:$0xff]
    %v191 = vld [vmem:[#allocation2 + $0x8] sm:$0xff]
    %v192 = vld [vmem:[#allocation2 + $0x10] sm:$0xff]
    %v193 = vld [vmem:[#allocation2 + $0x18] sm:$0xff]
    %v194 = vld [vmem:[#allocation2 + $0x20] sm:$0xff]
    %v195 = vld [vmem:[#allocation2 + $0x28] sm:$0xff]
    %v196 = vld [vmem:[#allocation2 + $0x30] sm:$0xff]
    %v197 = vld [vmem:[#allocation2 + $0x38] sm:$0xff]
    %v198 = vld [vmem:[#allocation2 + $0x40] sm:$0xff]
    %v199 = vld [vmem:[#allocation2 + $0x48] sm:$0xff]
    %v200 = vld [vmem:[#allocation2 + $0x50] sm:$0xff]
    %v201 = vld [vmem:[#allocation2 + $0x58] sm:$0xff]
    %v202 = vld [vmem:[#allocation2 + $0x60] sm:$0xff]
    %v203 = vld [vmem:[#allocation2 + $0x68] sm:$0xff]
    %v204 = vld [vmem:[#allocation2 + $0x70] sm:$0xff]
    %v205 = vld [vmem:[#allocation2 + $0x78] sm:$0xff]
    %v206 = vld [vmem:[%s4] sm:$0x1]
    %v208 = vperm.slane %v206, 0
    %210 = vmatpush.msra.mxu0 %v205
    %211 = vmatpush.msra.mxu0 %v204
    %212 = vmatpush.msra.mxu0 %v203
    %213 = vmatpush.msra.mxu0 %v202
    %214 = vmatpush.msra.mxu0 %v201
    %215 = vmatpush.msra.mxu0 %v200
    %216 = vmatpush.msra.mxu0 %v199
    %217 = vmatpush.msra.mxu0 %v198
    %218 = vmatpush.msra.mxu0 %v197
    %219 = vmatpush.msra.mxu0 %v196
    %220 = vmatpush.msra.mxu0 %v195
    %221 = vmatpush.msra.mxu0 %v194
    %222 = vmatpush.msra.mxu0 %v193
    %223 = vmatpush.msra.mxu0 %v192
    %224 = vmatpush.msra.mxu0 %v191
    %225 = vmatpush.msra.mxu0 %v190
    %226 = vmatmul.f32.gmra.mxu0 %v188
    %v227 = vpop.f32.mrf.mxu0
    %v228 = vadd.f32 %v208, %v227
    %229 = vmatmul.f32.gmra.mxu0 %v189
    %v230 = vpop.f32.mrf.mxu0
    %v231 = vadd.f32 %v208, %v230
    %232 = vdwg.mxu0
    %v233 = vadd.f32 %v228, %v36
    %v234 = vadd.f32 %v231, %v37
    %235 = vst [vmem:[%s5] sm:$0xff] %v233
    %236 = vst [vmem:[%s5 + $0x8] sm:$0xff] %v234
    // Predicated region
    $region26: #{apply.1} parent=1 // pred_check
      _
    $region27: #{apply.1} parent=1 // pred_check_branch
      %238 = sbr.rel (0) target = $region29
    $region28: #{apply.1} parent=1 // pred_region
      _
    $region29: #{apply.1} parent=1 // pred_fallthru
      _
    // Predicated region
    $region30: #{apply.1} parent=1 // pred_check
      _
    $region31: #{apply.1} parent=1 // pred_check_branch
      %240 = sbr.rel (0) target = $region33
    $region32: #{apply.1} parent=1 // pred_region
      _
    $region33: #{apply.1} parent=1 // pred_fallthru
      _
    %241 = vsyncpa [#allocation3], 1

</llo_original>
